<compile_context>
chip_gen: v6e
topology: v6e:2x2x1
jax: 0.10.0
libtpu: 0.0.40
codegen_flags: <defaults>
</compile_context>

<pallas_src>
import jax
import jax.numpy as jnp
from jax.experimental import pallas as pl
from jax.experimental.pallas import tpu as pltpu

EPS = 1e-5


def bn_relu_kernel(x_ref, p_ref, o_ref):
    # x_ref: (Cb, M) f32 — channel slab on sublanes, N*H*W on lanes.
    # p_ref: (Cb, 2) f32 — column 0 = gamma, column 1 = beta.
    x = x_ref[...]
    inv_m = 1.0 / float(x.shape[-1])

    # One streaming pass over the slab: per-channel sum and sum of squares.
    s = jnp.sum(x, axis=-1, keepdims=True)            # (Cb, 1)
    ss = jnp.sum(x * x, axis=-1, keepdims=True)       # (Cb, 1)

    mean = s * inv_m
    var = jnp.maximum(ss * inv_m - mean * mean, 0.0)   # biased var, clamped
    inv_std = jax.lax.rsqrt(var + EPS)

    gamma = p_ref[:, 0:1]                              # (Cb, 1)
    beta = p_ref[:, 1:2]                               # (Cb, 1)

    # Fold BN into a single per-channel scale/shift.
    a = gamma * inv_std                                # (Cb, 1)
    b = beta - mean * a                                # (Cb, 1)

    # Re-read the ref (cheap vld) instead of keeping `x` live through the
    # reduction epilogue — avoids spilling a ~126-vreg live range.
    o_ref[...] = jnp.maximum(x_ref[...] * a + b, 0.0).astype(o_ref.dtype)


def batchnorm_relu(x_nchw, gamma, beta, *, channel_blocks=2):
    """x_nchw: (N, C, H, W) float32. gamma, beta: (C,) float32."""
    N, C, H, W = x_nchw.shape
    M = N * H * W

    # (C, N*H*W) view. For N == 1 this is a free reinterpretation of NCHW;
    # for N > 1 a transpose is required to keep per-channel rows contiguous.
    if N == 1:
        x2d = x_nchw.reshape(C, M)
    else:
        x2d = jnp.transpose(x_nchw, (1, 0, 2, 3)).reshape(C, M)

    params = jnp.stack(
        [gamma.astype(jnp.float32), beta.astype(jnp.float32)], axis=-1
    )  # (C, 2)

    # Pick a channel-slab split: each block must hold full rows (all N*H*W)
    # per channel so the batch statistics stay exact.
    nb = channel_blocks
    if C % nb != 0 or (C // nb) % 8 != 0:
        nb = 1
    cb = C // nb

    out2d = pl.pallas_call(
        bn_relu_kernel,
        out_shape=jax.ShapeDtypeStruct((C, M), x2d.dtype),
        grid=(nb,),
        in_specs=[
            pl.BlockSpec((cb, M), lambda i: (i, 0)),
            pl.BlockSpec((cb, 2), lambda i: (i, 0)),
        ],
        out_specs=pl.BlockSpec((cb, M), lambda i: (i, 0)),
        compiler_params=pltpu.CompilerParams(
            dimension_semantics=("parallel",),
        ),
    )(x2d, params)

    if N == 1:
        return out2d.reshape(N, C, H, W)
    return jnp.transpose(out2d.reshape(C, N, H, W), (1, 0, 2, 3))


def _reference(x_nchw, gamma, beta):
    mean = jnp.mean(x_nchw, axis=(0, 2, 3), keepdims=True)
    var = jnp.mean((x_nchw - mean) ** 2, axis=(0, 2, 3), keepdims=True)
    y = (x_nchw - mean) * jax.lax.rsqrt(var + EPS)
    y = y * gamma.reshape(1, -1, 1, 1) + beta.reshape(1, -1, 1, 1)
    return jnp.maximum(y, 0.0)


if __name__ == "__main__":
    # Shape implied by the module: x59 ~ (1, 144, 28, 28), NCHW.
    N, C, H, W = 1, 144, 28, 28

    key = jax.random.PRNGKey(0)
    kx, kg, kb = jax.random.split(key, 3)
    x = jax.random.normal(kx, (N, C, H, W), dtype=jnp.float32)
    # Deterministic synthetic BN parameters (not a checkpoint load).
    gamma = 1.0 + 0.1 * jax.random.normal(kg, (C,), dtype=jnp.float32)
    beta = 0.1 * jax.random.normal(kb, (C,), dtype=jnp.float32)

    out = batchnorm_relu(x, gamma, beta)
    out = jax.block_until_ready(out)

    ref = _reference(x, gamma, beta)
    assert out.shape == (N, C, H, W)
    assert jnp.allclose(out, ref, atol=1e-4, rtol=1e-4), "mismatch vs reference"

    print("KERNEL_OK")
</pallas_src>

<mosaic_0001>
module attributes {stable_mosaic.version = 11 : i64} {
  func.func @bn_relu_kernel(%arg0: i32, %arg1: memref<72x784xf32, #tpu.memory_space<vmem>>, %arg2: memref<72x2xf32, #tpu.memory_space<vmem>>, %arg3: memref<72x784xf32, #tpu.memory_space<vmem>>) attributes {dimension_semantics = [#tpu.dimension_semantics<parallel>], iteration_bounds = array<i64: 2>, scalar_prefetch = 0 : i64, scratch_operands = 0 : i64, tpu.core_type = #tpu.core_type<tc>, window_params = [{transform_indices = @transform_0, window_bounds = array<i64: 72, 784>}, {transform_indices = @transform_1, window_bounds = array<i64: 72, 2>}, {transform_indices = @transform_2, window_bounds = array<i64: 72, 784>}]} {
    %c0 = arith.constant 0 : index
    %c0_0 = arith.constant 0 : index
    %0 = vector.load %arg1[%c0, %c0_0] : memref<72x784xf32, #tpu.memory_space<vmem>>, vector<72x784xf32>
    %cst = arith.constant dense<0.000000e+00> : vector<72xf32>
    %1 = vector.multi_reduction <add>, %0, %cst [1] : vector<72x784xf32> to vector<72xf32>
    %2 = vector.shape_cast %1 : vector<72xf32> to vector<72x1xf32>
    %3 = arith.mulf %0, %0 : vector<72x784xf32>
    %cst_1 = arith.constant dense<0.000000e+00> : vector<72xf32>
    %4 = vector.multi_reduction <add>, %3, %cst_1 [1] : vector<72x784xf32> to vector<72xf32>
    %5 = vector.shape_cast %4 : vector<72xf32> to vector<72x1xf32>
    %cst_2 = arith.constant 0.00127551018 : f32
    %6 = vector.broadcast %cst_2 : f32 to vector<72x1xf32>
    %7 = arith.mulf %2, %6 : vector<72x1xf32>
    %cst_3 = arith.constant 0.00127551018 : f32
    %8 = vector.broadcast %cst_3 : f32 to vector<72x1xf32>
    %9 = arith.mulf %5, %8 : vector<72x1xf32>
    %10 = arith.mulf %7, %7 : vector<72x1xf32>
    %11 = arith.subf %9, %10 : vector<72x1xf32>
    %cst_4 = arith.constant 0.000000e+00 : f32
    %12 = vector.broadcast %cst_4 : f32 to vector<72x1xf32>
    %13 = arith.maximumf %11, %12 : vector<72x1xf32>
    %cst_5 = arith.constant 9.99999974E-6 : f32
    %14 = vector.broadcast %cst_5 : f32 to vector<72x1xf32>
    %15 = arith.addf %13, %14 : vector<72x1xf32>
    %16 = math.rsqrt %15 : vector<72x1xf32>
    %c0_6 = arith.constant 0 : index
    %c0_7 = arith.constant 0 : index
    %17 = vector.load %arg2[%c0_6, %c0_7] : memref<72x2xf32, #tpu.memory_space<vmem>>, vector<72x1xf32>
    %c0_8 = arith.constant 0 : index
    %c1 = arith.constant 1 : index
    %18 = vector.load %arg2[%c0_8, %c1] : memref<72x2xf32, #tpu.memory_space<vmem>>, vector<72x1xf32>
    %19 = arith.mulf %17, %16 : vector<72x1xf32>
    %20 = arith.mulf %7, %19 : vector<72x1xf32>
    %21 = arith.subf %18, %20 : vector<72x1xf32>
    %c0_9 = arith.constant 0 : index
    %c0_10 = arith.constant 0 : index
    %22 = vector.load %arg1[%c0_9, %c0_10] : memref<72x784xf32, #tpu.memory_space<vmem>>, vector<72x784xf32>
    %23 = vector.broadcast %19 : vector<72x1xf32> to vector<72x784xf32>
    %24 = arith.mulf %22, %23 : vector<72x784xf32>
    %25 = vector.broadcast %21 : vector<72x1xf32> to vector<72x784xf32>
    %26 = arith.addf %24, %25 : vector<72x784xf32>
    %cst_11 = arith.constant 0.000000e+00 : f32
    %27 = vector.broadcast %cst_11 : f32 to vector<72x784xf32>
    %28 = arith.maximumf %26, %27 : vector<72x784xf32>
    %c0_12 = arith.constant 0 : index
    %c0_13 = arith.constant 0 : index
    %29 = vector.load %arg3[%c0_12, %c0_13] : memref<72x784xf32, #tpu.memory_space<vmem>>, vector<72x784xf32>
    tpu.vector_store %arg3[%c0_12, %c0_13], %28 {strides = array<i32>} : memref<72x784xf32, #tpu.memory_space<vmem>>, vector<72x784xf32>,
    return
  }
  func.func @transform_0(%arg0: i32) -> (i32, i32) {
    %c0_i32 = arith.constant 0 : i32
    %c0_i32_0 = arith.constant 0 : i32
    return %arg0, %c0_i32 : i32, i32
  }
  func.func @transform_1(%arg0: i32) -> (i32, i32) {
    %c0_i32 = arith.constant 0 : i32
    %c0_i32_0 = arith.constant 0 : i32
    return %arg0, %c0_i32 : i32, i32
  }
  func.func @transform_2(%arg0: i32) -> (i32, i32) {
    %c0_i32 = arith.constant 0 : i32
    %c0_i32_0 = arith.constant 0 : i32
    return %arg0, %c0_i32 : i32, i32
  }
}

</mosaic_0001>

<llo_original>
// kernel: tpu_custom_call.1
$region0: #{tpu_custom_call.1}
  #allocation0 [shape = 'u32[]', space=smem, size = 0x4, offset = 0x4, fixed_abs, tag = 'smem constant byte address 0x4 - core index']
  #allocation1 [shape = 'u32[144,128]{1,0:T(1,128)}', space=vmem, size = 0x12000, scoped, tag = 'internal scratch']
  %s0 = inlined_call_operand.hbm [shape: f32[144,784], index: 0, kind: input, shape index: {}]
  %s1 = inlined_call_operand.vmem [shape: f32[144,2], index: 1, kind: input, shape index: {}]
  %s2 = inlined_call_operand.hbm [shape: f32[144,784], index: 2, kind: output, shape index: {}]
  %s3 = sld [smem:[#allocation0]]
  $region45: #{tpu_custom_call.1} parent=0
    _
  %s5 = ssub.s32 1, %s3
  %s6 = scalar_select 0, %s5, %s3
  $region1: #{tpu_custom_call.1} parent=0
    #allocation2 [shape = 'u8[516096]{0}', space=vmem, size = 0x7e000, scoped, tag = 'input window, operand 0']
    #allocation3 [shape = 's32[2]{0}', space=sflag, size = 0x8, scoped, tag = 'scoped memory for tpu_custom_call.1']
    #allocation4 [shape = 's32[2]{0}', space=sflag, size = 0x8, scoped, tag = 'scoped memory for tpu_custom_call.1']
    #allocation5 [shape = 'u8[516096]{0}', space=vmem, size = 0x7e000, scoped, tag = 'output window, operand 0']
    %7 = vsyncpa [#allocation3], 0
    %s8 = scalar_lea.sflag [#allocation3], 1
    %9 = vsyncpa %s8, 0
    %10 = vsyncpa [#allocation4], 0
    %s11 = scalar_lea.sflag [#allocation4], 1
    %12 = vsyncpa %s11, 0
    loop: start=0, step=1, limit=4
    $region2: #{tpu_custom_call.1} parent=1 // loop_pre_header
      _
    $region3: #{tpu_custom_call.1} parent=1 // loop_header
      %s14 = sphi 0, %s18
      %p15 = scmp.ge.s32.totalorder %s14, 4
      %s24 = sphi 0, %s26
      %s27 = sphi 0, %s24
      %s28 = sphi 0, %s27
      %s44 = sphi 0, %s28
      %s50 = sphi 0, %s52
      %s53 = sphi 0, %s50
      %s54 = sphi 0, %s53
      %s70 = sphi 0, %s54
      %s76 = sphi 0, %s78
      %s79 = sphi 0, %s76
      %s80 = sphi 0, %s79
      %s96 = sphi 0, %s80
    $region4: #{tpu_custom_call.1} parent=1 // loop_header_branch
      %17 = sbr.rel (%p15) target = $region8
    $region5: #{tpu_custom_call.1} parent=1 // loop_body
      %s19 = ssub.s32 %s14, 1
      %s20 = ssub.s32 %s14, 2
      %s21 = sadd.s32 %s14, 1
      %s22 = ssub.s32 %s14, %s21
      %p23 = scmp.eq.s32.totalorder %s22, 0
      %s25 = sadd.s32 %s24, 1
      %s26 = scalar_select %p23, %s24, %s25
      %p29 = pneg %p23
      %p30 = scmp.eq.s32.totalorder %s14, 1
      %p31 = por %p29, %p30
      %p32 = scmp.ne.s32.totalorder %s24, %s27
      %p33 = scmp.eq.s32.totalorder %s14, 0
      %p34 = por %p32, %p33
      %p35 = scmp.ne.s32.totalorder %s24, %s27
      %p36 = scmp.eq.s32.totalorder %s19, 1
      %p37 = por %p35, %p36
      %p38 = scmp.ne.s32.totalorder %s27, %s28
      %p39 = scmp.eq.s32.totalorder %s19, 0
      %p40 = por %p38, %p39
      %p41 = scmp.ne.s32.totalorder %s27, %s28
      %p42 = scmp.eq.s32.totalorder %s20, 1
      %p43 = por %p41, %p42
      %p45 = scmp.ne.s32.totalorder %s28, %s44
      %p46 = scmp.eq.s32.totalorder %s20, 0
      %p47 = por %p45, %p46
      %s48 = ssub.s32 %s14, %s21
      %p49 = scmp.eq.s32.totalorder %s48, 0
      %s51 = sadd.s32 %s50, 1
      %s52 = scalar_select %p49, %s50, %s51
      %p55 = pneg %p49
      %p56 = scmp.eq.s32.totalorder %s14, 1
      %p57 = por %p55, %p56
      %p58 = scmp.ne.s32.totalorder %s50, %s53
      %p59 = scmp.eq.s32.totalorder %s14, 0
      %p60 = por %p58, %p59
      %p61 = scmp.ne.s32.totalorder %s50, %s53
      %p62 = scmp.eq.s32.totalorder %s19, 1
      %p63 = por %p61, %p62
      %p64 = scmp.ne.s32.totalorder %s53, %s54
      %p65 = scmp.eq.s32.totalorder %s19, 0
      %p66 = por %p64, %p65
      %p67 = scmp.ne.s32.totalorder %s53, %s54
      %p68 = scmp.eq.s32.totalorder %s20, 1
      %p69 = por %p67, %p68
      %p71 = scmp.ne.s32.totalorder %s54, %s70
      %p72 = scmp.eq.s32.totalorder %s20, 0
      %p73 = por %p71, %p72
      %s74 = ssub.s32 %s14, %s21
      %p75 = scmp.eq.s32.totalorder %s74, 0
      %s77 = sadd.s32 %s76, 1
      %s78 = scalar_select %p75, %s76, %s77
      %p81 = pneg %p75
      %p82 = scmp.eq.s32.totalorder %s14, 1
      %p83 = por %p81, %p82
      %p84 = scmp.ne.s32.totalorder %s76, %s79
      %p85 = scmp.eq.s32.totalorder %s14, 0
      %p86 = por %p84, %p85
      %p87 = scmp.ne.s32.totalorder %s76, %s79
      %p88 = scmp.eq.s32.totalorder %s19, 1
      %p89 = por %p87, %p88
      %p90 = scmp.ne.s32.totalorder %s79, %s80
      %p91 = scmp.eq.s32.totalorder %s19, 0
      %p92 = por %p90, %p91
      %p93 = scmp.ne.s32.totalorder %s79, %s80
      %p94 = scmp.eq.s32.totalorder %s20, 1
      %p95 = por %p93, %p94
      %p97 = scmp.ne.s32.totalorder %s80, %s96
      %p98 = scmp.eq.s32.totalorder %s20, 0
      %p99 = por %p97, %p98
      %p100 = scmp.le.s32.totalorder 1, %s14
      %p101 = scmp.lt.s32.totalorder %s14, 3
      %p102 = pnand %p100, %p101
      %p103 = pneg %p102
      // Predicated region
      $region9: #{tpu_custom_call.1} parent=5 // pred_check
        _
      $region10: #{tpu_custom_call.1} parent=5 // pred_check_branch
        %105 = sbr.rel (%p102) target = $region12
      $region11: #{tpu_custom_call.1} parent=5 // pred_region
        %s106 = ssub.s32 %s14, 1
      $region12: #{tpu_custom_call.1} parent=5 // pred_fallthru
        _
      %p107 = scmp.lt.s32.totalorder %s14, 2
      // Predicated region
      $region13: #{tpu_custom_call.1} parent=5 // pred_check
        %p108 = pneg %p107
      $region14: #{tpu_custom_call.1} parent=5 // pred_check_branch
        %110 = sbr.rel (%p108) target = $region16
      $region15: #{tpu_custom_call.1} parent=5 // pred_region
        // Predicated region
        $region17: #{tpu_custom_call.1} parent=15 // pred_check
          %p111 = pneg %p34
        $region18: #{tpu_custom_call.1} parent=15 // pred_check_branch
          %113 = sbr.rel (%p111) target = $region20
        $region19: #{tpu_custom_call.1} parent=15 // pred_region
          %s114 = sand.u32 %s24, 1
          %s115 = scalar_lea.sflag [#allocation3], %s114
          %s116 = sand.u32 %s24, 1
          %s117 = smul.addr %s116, 504
          %s118 = scalar_lea.vmem [#allocation2], %s117
          %s119 = smul.u32 9, %s14
          %s121 = ssub.s32 8064, 8064
          %122 = vsyncadd %s115, %s121
          %s123 = smul.addr %s119, 7
          %s124 = smul.addr %s123, 128
          %s125 = scalar_lea.hbm %s0, %s124
          %s126 = sshll.u32 %s118, 4
          %s127 = int_to_ptr.vmem [resolvable:$true] %s126
          %132 = dma.hbm_to_vmem [thread:$0]  %s125, 8064, %s127, %s115, 896, 896, 56
        $region20: #{tpu_custom_call.1} parent=15 // pred_fallthru
          _
        // Predicated region
        $region21: #{tpu_custom_call.1} parent=15 // pred_check
          %p133 = pneg %p60
        $region22: #{tpu_custom_call.1} parent=15 // pred_check_branch
          %135 = sbr.rel (%p133) target = $region24
        $region23: #{tpu_custom_call.1} parent=15 // pred_region
          %s136 = smul.u32 9, %s14
          %p137 = scmp.lt.s32.totalorder %s136, 17
          %s138 = scalar_select %p137, %s136, 17
          %s139 = smul.addr %s138, 8
          %s140 = scalar_lea.vmem %s1, %s139
          %s141 = smul.u32 9, %s14
        $region24: #{tpu_custom_call.1} parent=15 // pred_fallthru
          _
      $region16: #{tpu_custom_call.1} parent=5 // pred_fallthru
        _
      %p142 = scmp.le.s32.totalorder 1, %s14
      %p143 = scmp.lt.s32.totalorder %s14, 3
      %p144 = pnand %p142, %p143
      %p145 = pneg %p144
      // Predicated region
      $region25: #{tpu_custom_call.1} parent=5 // pred_check
        _
      $region26: #{tpu_custom_call.1} parent=5 // pred_check_branch
        %147 = sbr.rel (%p144) target = $region28
      $region27: #{tpu_custom_call.1} parent=5 // pred_region
        %s148 = ssub.s32 %s14, 1
        %s149 = sand.u32 %s27, 1
        %s150 = scalar_lea.sflag [#allocation3], %s149
        %s151 = sand.u32 %s27, 1
        %s152 = smul.addr %s151, 504
        %s153 = scalar_lea.vmem [#allocation2], %s152
        // Predicated region
        $region29: #{tpu_custom_call.1} parent=27 // pred_check
          %p154 = pneg %p40
        $region30: #{tpu_custom_call.1} parent=27 // pred_check_branch
          %156 = sbr.rel (%p154) target = $region32
        $region31: #{tpu_custom_call.1} parent=27 // pred_region
          %157 = dma.done %s150, 8064
        $region32: #{tpu_custom_call.1} parent=27 // pred_fallthru
          _
        %s158 = sand.u32 %s27, 1
        %s159 = scalar_lea.sflag [#allocation3], %s158
        %s160 = sand.u32 %s27, 1
        %s161 = smul.addr %s160, 504
        %s162 = scalar_lea.vmem [#allocation2], %s161
        %p163 = pneg %p40
        %p164 = pneg %p37
        %s165 = smul.u32 9, %s19
        %p166 = scmp.lt.s32.totalorder %s165, 17
        %s167 = scalar_select %p166, %s165, 17
        %s168 = smul.addr %s167, 8
        %s169 = scalar_lea.vmem %s1, %s168
        %p170 = pneg %p66
        %p171 = pneg %p63
        %p172 = pneg %p92
        %p173 = pneg %p89
        %s174 = sand.u32 %s79, 1
        %s175 = scalar_lea.sflag [#allocation4], %s174
        %s176 = sand.u32 %s79, 1
        %s177 = smul.addr %s176, 504
        %s178 = scalar_lea.vmem [#allocation5], %s177
        %s179 = smul.u32 9, %s19
        %s180 = smul.u32 9, %s19
        %p181 = scmp.lt.s32.totalorder %s180, 17
        %s182 = scalar_select %p181, %s180, 17
        %s183 = smul.addr %s182, 8
        %s184 = scalar_lea.vmem %s1, %s183
        %s185 = smul.u32 9, %s19
        %s186 = smul.u32 9, %s19
        %v187 = vld [vmem:[%s153] sm:$0xff]
        %v188 = vld [vmem:[%s153 + $0x8] sm:$0xff]
        %v189 = vld [vmem:[%s153 + $0x10] sm:$0xff]
        %v190 = vld [vmem:[%s153 + $0x18] sm:$0xff]
        %v191 = vld [vmem:[%s153 + $0x20] sm:$0xff]
        %v192 = vld [vmem:[%s153 + $0x28] sm:$0xff]
        %v193 = vld [vmem:[%s153 + $0x30] sm:$0xff]
        %v194 = vld [vmem:[%s153 + $0x38] sm:$0xff]
        %v195 = vld [vmem:[%s153 + $0x40] sm:$0xff]
        %v196 = vld [vmem:[%s153 + $0x48] sm:$0xff]
        %v197 = vld [vmem:[%s153 + $0x50] sm:$0xff]
        %v198 = vld [vmem:[%s153 + $0x58] sm:$0xff]
        %v199 = vld [vmem:[%s153 + $0x60] sm:$0xff]
        %v200 = vld [vmem:[%s153 + $0x68] sm:$0xff]
        %v201 = vld [vmem:[%s153 + $0x70] sm:$0xff]
        %v202 = vld [vmem:[%s153 + $0x78] sm:$0xff]
        %v203 = vld [vmem:[%s153 + $0x80] sm:$0xff]
        %v204 = vld [vmem:[%s153 + $0x88] sm:$0xff]
        %v205 = vld [vmem:[%s153 + $0x90] sm:$0xff]
        %v206 = vld [vmem:[%s153 + $0x98] sm:$0xff]
        %v207 = vld [vmem:[%s153 + $0xa0] sm:$0xff]
        %v208 = vld [vmem:[%s153 + $0xa8] sm:$0xff]
        %v209 = vld [vmem:[%s153 + $0xb0] sm:$0xff]
        %v210 = vld [vmem:[%s153 + $0xb8] sm:$0xff]
        %v211 = vld [vmem:[%s153 + $0xc0] sm:$0xff]
        %v212 = vld [vmem:[%s153 + $0xc8] sm:$0xff]
        %v213 = vld [vmem:[%s153 + $0xd0] sm:$0xff]
        %v214 = vld [vmem:[%s153 + $0xd8] sm:$0xff]
        %v215 = vld [vmem:[%s153 + $0xe0] sm:$0xff]
        %v216 = vld [vmem:[%s153 + $0xe8] sm:$0xff]
        %v217 = vld [vmem:[%s153 + $0xf0] sm:$0xff]
        %v218 = vld [vmem:[%s153 + $0xf8] sm:$0xff]
        %v219 = vld [vmem:[%s153 + $0x100] sm:$0xff]
        %v220 = vld [vmem:[%s153 + $0x108] sm:$0xff]
        %v221 = vld [vmem:[%s153 + $0x110] sm:$0xff]
        %v222 = vld [vmem:[%s153 + $0x118] sm:$0xff]
        %v223 = vld [vmem:[%s153 + $0x120] sm:$0xff]
        %v224 = vld [vmem:[%s153 + $0x128] sm:$0xff]
        %v225 = vld [vmem:[%s153 + $0x130] sm:$0xff]
        %v226 = vld [vmem:[%s153 + $0x138] sm:$0xff]
        %v227 = vld [vmem:[%s153 + $0x140] sm:$0xff]
        %v228 = vld [vmem:[%s153 + $0x148] sm:$0xff]
        %v229 = vld [vmem:[%s153 + $0x150] sm:$0xff]
        %v230 = vld [vmem:[%s153 + $0x158] sm:$0xff]
        %v231 = vld [vmem:[%s153 + $0x160] sm:$0xff]
        %v232 = vld [vmem:[%s153 + $0x168] sm:$0xff]
        %v233 = vld [vmem:[%s153 + $0x170] sm:$0xff]
        %v234 = vld [vmem:[%s153 + $0x178] sm:$0xff]
        %v235 = vld [vmem:[%s153 + $0x180] sm:$0xff]
        %v236 = vld [vmem:[%s153 + $0x188] sm:$0xff]
        %v237 = vld [vmem:[%s153 + $0x190] sm:$0xff]
        %v238 = vld [vmem:[%s153 + $0x198] sm:$0xff]
        %v239 = vld [vmem:[%s153 + $0x1a0] sm:$0xff]
        %v240 = vld [vmem:[%s153 + $0x1a8] sm:$0xff]
        %v241 = vld [vmem:[%s153 + $0x1b0] sm:$0xff]
        %v242 = vld [vmem:[%s153 + $0x1b8] sm:$0xff]
        %v243 = vld [vmem:[%s153 + $0x1c0] sm:$0xff]
        %v244 = vld [vmem:[%s153 + $0x1c8] sm:$0xff]
        %v245 = vld [vmem:[%s153 + $0x1d0] sm:$0xff]
        %v246 = vld [vmem:[%s153 + $0x1d8] sm:$0xff]
        %v247 = vld [vmem:[%s153 + $0x1e0] sm:$0xff]
        %v248 = vld [vmem:[%s153 + $0x1e8] sm:$0xff]
        %v249 = vld [vmem:[%s153 + $0x1f0] sm:$0xff]
        %v250 = vadd.f32 %v187, %v188
        %v251 = vadd.f32 %v250, %v189
        %v252 = vadd.f32 %v251, %v190
        %v253 = vadd.f32 %v252, %v191
        %v254 = vadd.f32 %v253, %v192
        %vm255 = vcmask 130048
        %v256 = vsel %vm255, %v193, 0.0
        %v257 = vadd.f32 %v254, %v256
        %258 = vadd.xlane.f32.xlu0 %v257
        %v259 = vpop.xlane.xlu0 %258
        %v260 = vadd.f32 %v194, %v195
        %v261 = vadd.f32 %v260, %v196
        %v262 = vadd.f32 %v261, %v197
        %v263 = vadd.f32 %v262, %v198
        %v264 = vadd.f32 %v263, %v199
        %v265 = vsel %vm255, %v200, 0.0
        %v266 = vadd.f32 %v264, %v265
        %267 = vadd.xlane.f32.xlu0 %v266
        %v268 = vpop.xlane.xlu0 %267
        %v269 = vadd.f32 %v201, %v202
        %v270 = vadd.f32 %v269, %v203
        %v271 = vadd.f32 %v270, %v204
        %v272 = vadd.f32 %v271, %v205
        %v273 = vadd.f32 %v272, %v206
        %v274 = vsel %vm255, %v207, 0.0
        %v275 = vadd.f32 %v273, %v274
        %276 = vadd.xlane.f32.xlu0 %v275
        %v277 = vpop.xlane.xlu0 %276
        %v278 = vadd.f32 %v208, %v209
        %v279 = vadd.f32 %v278, %v210
        %v280 = vadd.f32 %v279, %v211
        %v281 = vadd.f32 %v280, %v212
        %v282 = vadd.f32 %v281, %v213
        %v283 = vsel %vm255, %v214, 0.0
        %v284 = vadd.f32 %v282, %v283
        %285 = vadd.xlane.f32.xlu0 %v284
        %v286 = vpop.xlane.xlu0 %285
        %v287 = vadd.f32 %v215, %v216
        %v288 = vadd.f32 %v287, %v217
        %v289 = vadd.f32 %v288, %v218
        %v290 = vadd.f32 %v289, %v219
        %v291 = vadd.f32 %v290, %v220
        %v292 = vsel %vm255, %v221, 0.0
        %v293 = vadd.f32 %v291, %v292
        %294 = vadd.xlane.f32.xlu0 %v293
        %v295 = vpop.xlane.xlu0 %294
        %v296 = vadd.f32 %v222, %v223
        %v297 = vadd.f32 %v296, %v224
        %v298 = vadd.f32 %v297, %v225
        %v299 = vadd.f32 %v298, %v226
        %v300 = vadd.f32 %v299, %v227
        %v301 = vsel %vm255, %v228, 0.0
        %v302 = vadd.f32 %v300, %v301
        %303 = vadd.xlane.f32.xlu0 %v302
        %v304 = vpop.xlane.xlu0 %303
        %v305 = vadd.f32 %v229, %v230
        %v306 = vadd.f32 %v305, %v231
        %v307 = vadd.f32 %v306, %v232
        %v308 = vadd.f32 %v307, %v233
        %v309 = vadd.f32 %v308, %v234
        %v310 = vsel %vm255, %v235, 0.0
        %v311 = vadd.f32 %v309, %v310
        %312 = vadd.xlane.f32.xlu0 %v311
        %v313 = vpop.xlane.xlu0 %312
        %v314 = vadd.f32 %v236, %v237
        %v315 = vadd.f32 %v314, %v238
        %v316 = vadd.f32 %v315, %v239
        %v317 = vadd.f32 %v316, %v240
        %v318 = vadd.f32 %v317, %v241
        %v319 = vsel %vm255, %v242, 0.0
        %v320 = vadd.f32 %v318, %v319
        %321 = vadd.xlane.f32.xlu0 %v320
        %v322 = vpop.xlane.xlu0 %321
        %v323 = vadd.f32 %v243, %v244
        %v324 = vadd.f32 %v323, %v245
        %v325 = vadd.f32 %v324, %v246
        %v326 = vadd.f32 %v325, %v247
        %v327 = vadd.f32 %v326, %v248
        %v328 = vsel %vm255, %v249, 0.0
        %v329 = vadd.f32 %v327, %v328
        %330 = vadd.xlane.f32.xlu0 %v329
        %v331 = vpop.xlane.xlu0 %330
        %v332 = vmul.f32 %v187, %v187
        %v333 = vmul.f32 %v188, %v188
        %v334 = vmul.f32 %v189, %v189
        %v335 = vmul.f32 %v190, %v190
        %v336 = vmul.f32 %v191, %v191
        %v337 = vmul.f32 %v192, %v192
        %v338 = vmul.f32 %v193, %v193
        %v339 = vmul.f32 %v194, %v194
        %v340 = vmul.f32 %v195, %v195
        %v341 = vmul.f32 %v196, %v196
        %v342 = vmul.f32 %v197, %v197
        %v343 = vmul.f32 %v198, %v198
        %v344 = vmul.f32 %v199, %v199
        %v345 = vmul.f32 %v200, %v200
        %v346 = vmul.f32 %v201, %v201
        %v347 = vmul.f32 %v202, %v202
        %v348 = vmul.f32 %v203, %v203
        %v349 = vmul.f32 %v204, %v204
        %v350 = vmul.f32 %v205, %v205
        %v351 = vmul.f32 %v206, %v206
        %v352 = vmul.f32 %v207, %v207
        %v353 = vmul.f32 %v208, %v208
        %v354 = vmul.f32 %v209, %v209
        %v355 = vmul.f32 %v210, %v210
        %v356 = vmul.f32 %v211, %v211
        %v357 = vmul.f32 %v212, %v212
        %v358 = vmul.f32 %v213, %v213
        %v359 = vmul.f32 %v214, %v214
        %v360 = vmul.f32 %v215, %v215
        %v361 = vmul.f32 %v216, %v216
        %v362 = vmul.f32 %v217, %v217
        %v363 = vmul.f32 %v218, %v218
        %v364 = vmul.f32 %v219, %v219
        %v365 = vmul.f32 %v220, %v220
        %v366 = vmul.f32 %v221, %v221
        %v367 = vmul.f32 %v222, %v222
        %v368 = vmul.f32 %v223, %v223
        %v369 = vmul.f32 %v224, %v224
        %v370 = vmul.f32 %v225, %v225
        %v371 = vmul.f32 %v226, %v226
        %v372 = vmul.f32 %v227, %v227
        %v373 = vmul.f32 %v228, %v228
        %v374 = vmul.f32 %v229, %v229
        %v375 = vmul.f32 %v230, %v230
        %v376 = vmul.f32 %v231, %v231
        %v377 = vmul.f32 %v232, %v232
        %v378 = vmul.f32 %v233, %v233
        %v379 = vmul.f32 %v234, %v234
        %v380 = vmul.f32 %v235, %v235
        %v381 = vmul.f32 %v236, %v236
        %v382 = vmul.f32 %v237, %v237
        %v383 = vmul.f32 %v238, %v238
        %v384 = vmul.f32 %v239, %v239
        %v385 = vmul.f32 %v240, %v240
        %v386 = vmul.f32 %v241, %v241
        %v387 = vmul.f32 %v242, %v242
        %v388 = vmul.f32 %v243, %v243
        %v389 = vmul.f32 %v244, %v244
        %v390 = vmul.f32 %v245, %v245
        %v391 = vmul.f32 %v246, %v246
        %v392 = vmul.f32 %v247, %v247
        %v393 = vmul.f32 %v248, %v248
        %v394 = vmul.f32 %v249, %v249
        %v395 = vadd.f32 %v332, %v333
        %v396 = vadd.f32 %v395, %v334
        %v397 = vadd.f32 %v396, %v335
        %v398 = vadd.f32 %v397, %v336
        %v399 = vadd.f32 %v398, %v337
        %v400 = vsel %vm255, %v338, 0.0
        %v401 = vadd.f32 %v399, %v400
        %402 = vadd.xlane.f32.xlu0 %v401
        %v403 = vpop.xlane.xlu0 %402
        %v404 = vadd.f32 %v339, %v340
        %v405 = vadd.f32 %v404, %v341
        %v406 = vadd.f32 %v405, %v342
        %v407 = vadd.f32 %v406, %v343
        %v408 = vadd.f32 %v407, %v344
        %v409 = vsel %vm255, %v345, 0.0
        %v410 = vadd.f32 %v408, %v409
        %411 = vadd.xlane.f32.xlu0 %v410
        %v412 = vpop.xlane.xlu0 %411
        %v413 = vadd.f32 %v346, %v347
        %v414 = vadd.f32 %v413, %v348
        %v415 = vadd.f32 %v414, %v349
        %v416 = vadd.f32 %v415, %v350
        %v417 = vadd.f32 %v416, %v351
        %v418 = vsel %vm255, %v352, 0.0
        %v419 = vadd.f32 %v417, %v418
        %420 = vadd.xlane.f32.xlu0 %v419
        %v421 = vpop.xlane.xlu0 %420
        %v422 = vadd.f32 %v353, %v354
        %v423 = vadd.f32 %v422, %v355
        %v424 = vadd.f32 %v423, %v356
        %v425 = vadd.f32 %v424, %v357
        %v426 = vadd.f32 %v425, %v358
        %v427 = vsel %vm255, %v359, 0.0
        %v428 = vadd.f32 %v426, %v427
        %429 = vadd.xlane.f32.xlu0 %v428
        %v430 = vpop.xlane.xlu0 %429
        %v431 = vadd.f32 %v360, %v361
        %v432 = vadd.f32 %v431, %v362
        %v433 = vadd.f32 %v432, %v363
        %v434 = vadd.f32 %v433, %v364
        %v435 = vadd.f32 %v434, %v365
        %v436 = vsel %vm255, %v366, 0.0
        %v437 = vadd.f32 %v435, %v436
        %438 = vadd.xlane.f32.xlu0 %v437
        %v439 = vpop.xlane.xlu0 %438
        %v440 = vadd.f32 %v367, %v368
        %v441 = vadd.f32 %v440, %v369
        %v442 = vadd.f32 %v441, %v370
        %v443 = vadd.f32 %v442, %v371
        %v444 = vadd.f32 %v443, %v372
        %v445 = vsel %vm255, %v373, 0.0
        %v446 = vadd.f32 %v444, %v445
        %447 = vadd.xlane.f32.xlu0 %v446
        %v448 = vpop.xlane.xlu0 %447
        %v449 = vadd.f32 %v374, %v375
        %v450 = vadd.f32 %v449, %v376
        %v451 = vadd.f32 %v450, %v377
        %v452 = vadd.f32 %v451, %v378
        %v453 = vadd.f32 %v452, %v379
        %v454 = vsel %vm255, %v380, 0.0
        %v455 = vadd.f32 %v453, %v454
        %456 = vadd.xlane.f32.xlu0 %v455
        %v457 = vpop.xlane.xlu0 %456
        %v458 = vadd.f32 %v381, %v382
        %v459 = vadd.f32 %v458, %v383
        %v460 = vadd.f32 %v459, %v384
        %v461 = vadd.f32 %v460, %v385
        %v462 = vadd.f32 %v461, %v386
        %v463 = vsel %vm255, %v387, 0.0
        %v464 = vadd.f32 %v462, %v463
        %465 = vadd.xlane.f32.xlu0 %v464
        %v466 = vpop.xlane.xlu0 %465
        %v467 = vadd.f32 %v388, %v389
        %v468 = vadd.f32 %v467, %v390
        %v469 = vadd.f32 %v468, %v391
        %v470 = vadd.f32 %v469, %v392
        %v471 = vadd.f32 %v470, %v393
        %v472 = vsel %vm255, %v394, 0.0
        %v473 = vadd.f32 %v471, %v472
        %474 = vadd.xlane.f32.xlu0 %v473
        %v475 = vpop.xlane.xlu0 %474
        %v476 = vmul.f32 %v259, 0.0012755102
        %v477 = vmul.f32 %v268, 0.0012755102
        %v478 = vmul.f32 %v277, 0.0012755102
        %v479 = vmul.f32 %v286, 0.0012755102
        %v480 = vmul.f32 %v295, 0.0012755102
        %v481 = vmul.f32 %v304, 0.0012755102
        %v482 = vmul.f32 %v313, 0.0012755102
        %v483 = vmul.f32 %v322, 0.0012755102
        %v484 = vmul.f32 %v331, 0.0012755102
        %v485 = vmul.f32 %v403, 0.0012755102
        %v486 = vmul.f32 %v412, 0.0012755102
        %v487 = vmul.f32 %v421, 0.0012755102
        %v488 = vmul.f32 %v430, 0.0012755102
        %v489 = vmul.f32 %v439, 0.0012755102
        %v490 = vmul.f32 %v448, 0.0012755102
        %v491 = vmul.f32 %v457, 0.0012755102
        %v492 = vmul.f32 %v466, 0.0012755102
        %v493 = vmul.f32 %v475, 0.0012755102
        %v494 = vmul.f32 %v476, %v476
        %v495 = vmul.f32 %v477, %v477
        %v496 = vmul.f32 %v478, %v478
        %v497 = vmul.f32 %v479, %v479
        %v498 = vmul.f32 %v480, %v480
        %v499 = vmul.f32 %v481, %v481
        %v500 = vmul.f32 %v482, %v482
        %v501 = vmul.f32 %v483, %v483
        %v502 = vmul.f32 %v484, %v484
        %v503 = vsub.f32 %v485, %v494
        %v504 = vsub.f32 %v486, %v495
        %v505 = vsub.f32 %v487, %v496
        %v506 = vsub.f32 %v488, %v497
        %v507 = vsub.f32 %v489, %v498
        %v508 = vsub.f32 %v490, %v499
        %v509 = vsub.f32 %v491, %v500
        %v510 = vsub.f32 %v492, %v501
        %v511 = vsub.f32 %v493, %v502
        %v512 = vmax.f32 %v503, 0.0
        %v513 = vmax.f32 %v504, 0.0
        %v514 = vmax.f32 %v505, 0.0
        %v515 = vmax.f32 %v506, 0.0
        %v516 = vmax.f32 %v507, 0.0
        %v517 = vmax.f32 %v508, 0.0
        %v518 = vmax.f32 %v509, 0.0
        %v519 = vmax.f32 %v510, 0.0
        %v520 = vmax.f32 %v511, 0.0
        %v521 = vadd.f32 %v512, 1e-05
        %v522 = vadd.f32 %v513, 1e-05
        %v523 = vadd.f32 %v514, 1e-05
        %v524 = vadd.f32 %v515, 1e-05
        %v525 = vadd.f32 %v516, 1e-05
        %v526 = vadd.f32 %v517, 1e-05
        %v527 = vadd.f32 %v518, 1e-05
        %v528 = vadd.f32 %v519, 1e-05
        %v529 = vadd.f32 %v520, 1e-05
        %v530 = vrsqrt.pop %v521
        %v531 = vrsqrt.pop %v522
        %v532 = vrsqrt.pop %v523
        %v533 = vrsqrt.pop %v524
        %v534 = vrsqrt.pop %v525
        %v535 = vrsqrt.pop %v526
        %v536 = vrsqrt.pop %v527
        %v537 = vrsqrt.pop %v528
        %v538 = vrsqrt.pop %v529
        %v539 = vld [vmem:[%s184] sm:$0xff]
        %v540 = vld [vmem:[%s184 + $0x8] sm:$0xff]
        %v541 = vld [vmem:[%s184 + $0x10] sm:$0xff]
        %v542 = vld [vmem:[%s184 + $0x18] sm:$0xff]
        %v543 = vld [vmem:[%s184 + $0x20] sm:$0xff]
        %v544 = vld [vmem:[%s184 + $0x28] sm:$0xff]
        %v545 = vld [vmem:[%s184 + $0x30] sm:$0xff]
        %v546 = vld [vmem:[%s184 + $0x38] sm:$0xff]
        %v547 = vld [vmem:[%s184 + $0x40] sm:$0xff]
        %v548 = vmul.f32 %v539, %v530
        %v549 = vmul.f32 %v540, %v531
        %v550 = vmul.f32 %v541, %v532
        %v551 = vmul.f32 %v542, %v533
        %v552 = vmul.f32 %v543, %v534
        %v553 = vmul.f32 %v544, %v535
        %v554 = vmul.f32 %v545, %v536
        %v555 = vmul.f32 %v546, %v537
        %v556 = vmul.f32 %v547, %v538
        %v557 = vmul.f32 %v476, %v548
        %v558 = vmul.f32 %v477, %v549
        %v559 = vmul.f32 %v478, %v550
        %v560 = vmul.f32 %v479, %v551
        %v561 = vmul.f32 %v480, %v552
        %v562 = vmul.f32 %v481, %v553
        %v563 = vmul.f32 %v482, %v554
        %v564 = vmul.f32 %v483, %v555
        %v565 = vmul.f32 %v484, %v556
        %575 = vrot.lane.b32.xlu0 %v557, 1
        %v576 = vpop.permute.xlu0 %575
        %577 = vrot.lane.b32.xlu0 %v558, 1
        %v578 = vpop.permute.xlu0 %577
        %579 = vrot.lane.b32.xlu0 %v559, 1
        %v580 = vpop.permute.xlu0 %579
        %581 = vrot.lane.b32.xlu0 %v560, 1
        %v582 = vpop.permute.xlu0 %581
        %583 = vrot.lane.b32.xlu0 %v561, 1
        %v584 = vpop.permute.xlu0 %583
        %585 = vrot.lane.b32.xlu0 %v562, 1
        %v586 = vpop.permute.xlu0 %585
        %587 = vrot.lane.b32.xlu0 %v563, 1
        %v588 = vpop.permute.xlu0 %587
        %589 = vrot.lane.b32.xlu0 %v564, 1
        %v590 = vpop.permute.xlu0 %589
        %591 = vrot.lane.b32.xlu0 %v565, 1
        %v592 = vpop.permute.xlu0 %591
        %v602 = vsub.f32 %v539, %v576
        %v603 = vsub.f32 %v540, %v578
        %v604 = vsub.f32 %v541, %v580
        %v605 = vsub.f32 %v542, %v582
        %v606 = vsub.f32 %v543, %v584
        %v607 = vsub.f32 %v544, %v586
        %v608 = vsub.f32 %v545, %v588
        %v609 = vsub.f32 %v546, %v590
        %v610 = vsub.f32 %v547, %v592
        %612 = vset.pattern.permute.xlu0 0
        %613 = vperm.xlu0 %612, %v548
        %v614 = vpop.permute.xlu0 %613
        %617 = vset.pattern.permute.xlu0 0
        %618 = vperm.xlu0 %617, %v549
        %v619 = vpop.permute.xlu0 %618
        %622 = vset.pattern.permute.xlu0 0
        %623 = vperm.xlu0 %622, %v550
        %v624 = vpop.permute.xlu0 %623
        %627 = vset.pattern.permute.xlu0 0
        %628 = vperm.xlu0 %627, %v551
        %v629 = vpop.permute.xlu0 %628
        %632 = vset.pattern.permute.xlu0 0
        %633 = vperm.xlu0 %632, %v552
        %v634 = vpop.permute.xlu0 %633
        %637 = vset.pattern.permute.xlu0 0
        %638 = vperm.xlu0 %637, %v553
        %v639 = vpop.permute.xlu0 %638
        %642 = vset.pattern.permute.xlu0 0
        %643 = vperm.xlu0 %642, %v554
        %v644 = vpop.permute.xlu0 %643
        %647 = vset.pattern.permute.xlu0 0
        %648 = vperm.xlu0 %647, %v555
        %v649 = vpop.permute.xlu0 %648
        %652 = vset.pattern.permute.xlu0 0
        %653 = vperm.xlu0 %652, %v556
        %v654 = vpop.permute.xlu0 %653
        %v656 = vmul.f32 %v187, %v614
        %v657 = vmul.f32 %v188, %v614
        %v658 = vmul.f32 %v189, %v614
        %v659 = vmul.f32 %v190, %v614
        %v660 = vmul.f32 %v191, %v614
        %v661 = vmul.f32 %v192, %v614
        %v662 = vmul.f32 %v193, %v614
        %v663 = vmul.f32 %v194, %v619
        %v664 = vmul.f32 %v195, %v619
        %v665 = vmul.f32 %v196, %v619
        %v666 = vmul.f32 %v197, %v619
        %v667 = vmul.f32 %v198, %v619
        %v668 = vmul.f32 %v199, %v619
        %v669 = vmul.f32 %v200, %v619
        %v670 = vmul.f32 %v201, %v624
        %v671 = vmul.f32 %v202, %v624
        %v672 = vmul.f32 %v203, %v624
        %v673 = vmul.f32 %v204, %v624
        %v674 = vmul.f32 %v205, %v624
        %v675 = vmul.f32 %v206, %v624
        %v676 = vmul.f32 %v207, %v624
        %v677 = vmul.f32 %v208, %v629
        %v678 = vmul.f32 %v209, %v629
        %v679 = vmul.f32 %v210, %v629
        %v680 = vmul.f32 %v211, %v629
        %v681 = vmul.f32 %v212, %v629
        %v682 = vmul.f32 %v213, %v629
        %v683 = vmul.f32 %v214, %v629
        %v684 = vmul.f32 %v215, %v634
        %v685 = vmul.f32 %v216, %v634
        %v686 = vmul.f32 %v217, %v634
        %v687 = vmul.f32 %v218, %v634
        %v688 = vmul.f32 %v219, %v634
        %v689 = vmul.f32 %v220, %v634
        %v690 = vmul.f32 %v221, %v634
        %v691 = vmul.f32 %v222, %v639
        %v692 = vmul.f32 %v223, %v639
        %v693 = vmul.f32 %v224, %v639
        %v694 = vmul.f32 %v225, %v639
        %v695 = vmul.f32 %v226, %v639
        %v696 = vmul.f32 %v227, %v639
        %v697 = vmul.f32 %v228, %v639
        %v698 = vmul.f32 %v229, %v644
        %v699 = vmul.f32 %v230, %v644
        %v700 = vmul.f32 %v231, %v644
        %v701 = vmul.f32 %v232, %v644
        %v702 = vmul.f32 %v233, %v644
        %v703 = vmul.f32 %v234, %v644
        %v704 = vmul.f32 %v235, %v644
        %v705 = vmul.f32 %v236, %v649
        %v706 = vmul.f32 %v237, %v649
        %v707 = vmul.f32 %v238, %v649
        %v708 = vmul.f32 %v239, %v649
        %v709 = vmul.f32 %v240, %v649
        %v710 = vmul.f32 %v241, %v649
        %v711 = vmul.f32 %v242, %v649
        %v712 = vmul.f32 %v243, %v654
        %v713 = vmul.f32 %v244, %v654
        %v714 = vmul.f32 %v245, %v654
        %v715 = vmul.f32 %v246, %v654
        %v716 = vmul.f32 %v247, %v654
        %v717 = vmul.f32 %v248, %v654
        %v718 = vmul.f32 %v249, %v654
        %720 = vset.pattern.permute.xlu0 1
        %721 = vperm.xlu0 %720, %v602
        %v722 = vpop.permute.xlu0 %721
        %725 = vset.pattern.permute.xlu0 1
        %726 = vperm.xlu0 %725, %v603
        %v727 = vpop.permute.xlu0 %726
        %730 = vset.pattern.permute.xlu0 1
        %731 = vperm.xlu0 %730, %v604
        %v732 = vpop.permute.xlu0 %731
        %735 = vset.pattern.permute.xlu0 1
        %736 = vperm.xlu0 %735, %v605
        %v737 = vpop.permute.xlu0 %736
        %740 = vset.pattern.permute.xlu0 1
        %741 = vperm.xlu0 %740, %v606
        %v742 = vpop.permute.xlu0 %741
        %745 = vset.pattern.permute.xlu0 1
        %746 = vperm.xlu0 %745, %v607
        %v747 = vpop.permute.xlu0 %746
        %750 = vset.pattern.permute.xlu0 1
        %751 = vperm.xlu0 %750, %v608
        %v752 = vpop.permute.xlu0 %751
        %755 = vset.pattern.permute.xlu0 1
        %756 = vperm.xlu0 %755, %v609
        %v757 = vpop.permute.xlu0 %756
        %760 = vset.pattern.permute.xlu0 1
        %761 = vperm.xlu0 %760, %v610
        %v762 = vpop.permute.xlu0 %761
        %v764 = vadd.f32 %v656, %v722
        %v765 = vadd.f32 %v657, %v722
        %v766 = vadd.f32 %v658, %v722
        %v767 = vadd.f32 %v659, %v722
        %v768 = vadd.f32 %v660, %v722
        %v769 = vadd.f32 %v661, %v722
        %v770 = vadd.f32 %v662, %v722
        %v771 = vadd.f32 %v663, %v727
        %v772 = vadd.f32 %v664, %v727
        %v773 = vadd.f32 %v665, %v727
        %v774 = vadd.f32 %v666, %v727
        %v775 = vadd.f32 %v667, %v727
        %v776 = vadd.f32 %v668, %v727
        %v777 = vadd.f32 %v669, %v727
        %v778 = vadd.f32 %v670, %v732
        %v779 = vadd.f32 %v671, %v732
        %v780 = vadd.f32 %v672, %v732
        %v781 = vadd.f32 %v673, %v732
        %v782 = vadd.f32 %v674, %v732
        %v783 = vadd.f32 %v675, %v732
        %v784 = vadd.f32 %v676, %v732
        %v785 = vadd.f32 %v677, %v737
        %v786 = vadd.f32 %v678, %v737
        %v787 = vadd.f32 %v679, %v737
        %v788 = vadd.f32 %v680, %v737
        %v789 = vadd.f32 %v681, %v737
        %v790 = vadd.f32 %v682, %v737
        %v791 = vadd.f32 %v683, %v737
        %v792 = vadd.f32 %v684, %v742
        %v793 = vadd.f32 %v685, %v742
        %v794 = vadd.f32 %v686, %v742
        %v795 = vadd.f32 %v687, %v742
        %v796 = vadd.f32 %v688, %v742
        %v797 = vadd.f32 %v689, %v742
        %v798 = vadd.f32 %v690, %v742
        %v799 = vadd.f32 %v691, %v747
        %v800 = vadd.f32 %v692, %v747
        %v801 = vadd.f32 %v693, %v747
        %v802 = vadd.f32 %v694, %v747
        %v803 = vadd.f32 %v695, %v747
        %v804 = vadd.f32 %v696, %v747
        %v805 = vadd.f32 %v697, %v747
        %v806 = vadd.f32 %v698, %v752
        %v807 = vadd.f32 %v699, %v752
        %v808 = vadd.f32 %v700, %v752
        %v809 = vadd.f32 %v701, %v752
        %v810 = vadd.f32 %v702, %v752
        %v811 = vadd.f32 %v703, %v752
        %v812 = vadd.f32 %v704, %v752
        %v813 = vadd.f32 %v705, %v757
        %v814 = vadd.f32 %v706, %v757
        %v815 = vadd.f32 %v707, %v757
        %v816 = vadd.f32 %v708, %v757
        %v817 = vadd.f32 %v709, %v757
        %v818 = vadd.f32 %v710, %v757
        %v819 = vadd.f32 %v711, %v757
        %v820 = vadd.f32 %v712, %v762
        %v821 = vadd.f32 %v713, %v762
        %v822 = vadd.f32 %v714, %v762
        %v823 = vadd.f32 %v715, %v762
        %v824 = vadd.f32 %v716, %v762
        %v825 = vadd.f32 %v717, %v762
        %v826 = vadd.f32 %v718, %v762
        %v827 = vmax.f32 %v764, 0.0
        %v828 = vmax.f32 %v765, 0.0
        %v829 = vmax.f32 %v766, 0.0
        %v830 = vmax.f32 %v767, 0.0
        %v831 = vmax.f32 %v768, 0.0
        %v832 = vmax.f32 %v769, 0.0
        %v833 = vmax.f32 %v770, 0.0
        %v834 = vmax.f32 %v771, 0.0
        %v835 = vmax.f32 %v772, 0.0
        %v836 = vmax.f32 %v773, 0.0
        %v837 = vmax.f32 %v774, 0.0
        %v838 = vmax.f32 %v775, 0.0
        %v839 = vmax.f32 %v776, 0.0
        %v840 = vmax.f32 %v777, 0.0
        %v841 = vmax.f32 %v778, 0.0
        %v842 = vmax.f32 %v779, 0.0
        %v843 = vmax.f32 %v780, 0.0
        %v844 = vmax.f32 %v781, 0.0
        %v845 = vmax.f32 %v782, 0.0
        %v846 = vmax.f32 %v783, 0.0
        %v847 = vmax.f32 %v784, 0.0
        %v848 = vmax.f32 %v785, 0.0
        %v849 = vmax.f32 %v786, 0.0
        %v850 = vmax.f32 %v787, 0.0
        %v851 = vmax.f32 %v788, 0.0
        %v852 = vmax.f32 %v789, 0.0
        %v853 = vmax.f32 %v790, 0.0
        %v854 = vmax.f32 %v791, 0.0
        %v855 = vmax.f32 %v792, 0.0
        %v856 = vmax.f32 %v793, 0.0
        %v857 = vmax.f32 %v794, 0.0
        %v858 = vmax.f32 %v795, 0.0
        %v859 = vmax.f32 %v796, 0.0
        %v860 = vmax.f32 %v797, 0.0
        %v861 = vmax.f32 %v798, 0.0
        %v862 = vmax.f32 %v799, 0.0
        %v863 = vmax.f32 %v800, 0.0
        %v864 = vmax.f32 %v801, 0.0
        %v865 = vmax.f32 %v802, 0.0
        %v866 = vmax.f32 %v803, 0.0
        %v867 = vmax.f32 %v804, 0.0
        %v868 = vmax.f32 %v805, 0.0
        %v869 = vmax.f32 %v806, 0.0
        %v870 = vmax.f32 %v807, 0.0
        %v871 = vmax.f32 %v808, 0.0
        %v872 = vmax.f32 %v809, 0.0
        %v873 = vmax.f32 %v810, 0.0
        %v874 = vmax.f32 %v811, 0.0
        %v875 = vmax.f32 %v812, 0.0
        %v876 = vmax.f32 %v813, 0.0
        %v877 = vmax.f32 %v814, 0.0
        %v878 = vmax.f32 %v815, 0.0
        %v879 = vmax.f32 %v816, 0.0
        %v880 = vmax.f32 %v817, 0.0
        %v881 = vmax.f32 %v818, 0.0
        %v882 = vmax.f32 %v819, 0.0
        %v883 = vmax.f32 %v820, 0.0
        %v884 = vmax.f32 %v821, 0.0
        %v885 = vmax.f32 %v822, 0.0
        %v886 = vmax.f32 %v823, 0.0
        %v887 = vmax.f32 %v824, 0.0
        %v888 = vmax.f32 %v825, 0.0
        %v889 = vmax.f32 %v826, 0.0
        %890 = vst [vmem:[%s178] sm:$0xff] %v827
        %891 = vst [vmem:[%s178 + $0x8] sm:$0xff] %v828
        %892 = vst [vmem:[%s178 + $0x10] sm:$0xff] %v829
        %893 = vst [vmem:[%s178 + $0x18] sm:$0xff] %v830
        %894 = vst [vmem:[%s178 + $0x20] sm:$0xff] %v831
        %895 = vst [vmem:[%s178 + $0x28] sm:$0xff] %v832
        %896 = vst.msk [vmem:[%s178 + $0x30] sm:$0xff] %vm255, %v833
        %897 = vst [vmem:[%s178 + $0x38] sm:$0xff] %v834
        %898 = vst [vmem:[%s178 + $0x40] sm:$0xff] %v835
        %899 = vst [vmem:[%s178 + $0x48] sm:$0xff] %v836
        %900 = vst [vmem:[%s178 + $0x50] sm:$0xff] %v837
        %901 = vst [vmem:[%s178 + $0x58] sm:$0xff] %v838
        %902 = vst [vmem:[%s178 + $0x60] sm:$0xff] %v839
        %903 = vst.msk [vmem:[%s178 + $0x68] sm:$0xff] %vm255, %v840
        %904 = vst [vmem:[%s178 + $0x70] sm:$0xff] %v841
        %905 = vst [vmem:[%s178 + $0x78] sm:$0xff] %v842
        %906 = vst [vmem:[%s178 + $0x80] sm:$0xff] %v843
        %907 = vst [vmem:[%s178 + $0x88] sm:$0xff] %v844
        %908 = vst [vmem:[%s178 + $0x90] sm:$0xff] %v845
        %909 = vst [vmem:[%s178 + $0x98] sm:$0xff] %v846
        %910 = vst.msk [vmem:[%s178 + $0xa0] sm:$0xff] %vm255, %v847
        %911 = vst [vmem:[%s178 + $0xa8] sm:$0xff] %v848
        %912 = vst [vmem:[%s178 + $0xb0] sm:$0xff] %v849
        %913 = vst [vmem:[%s178 + $0xb8] sm:$0xff] %v850
        %914 = vst [vmem:[%s178 + $0xc0] sm:$0xff] %v851
        %915 = vst [vmem:[%s178 + $0xc8] sm:$0xff] %v852
        %916 = vst [vmem:[%s178 + $0xd0] sm:$0xff] %v853
        %917 = vst.msk [vmem:[%s178 + $0xd8] sm:$0xff] %vm255, %v854
        %918 = vst [vmem:[%s178 + $0xe0] sm:$0xff] %v855
        %919 = vst [vmem:[%s178 + $0xe8] sm:$0xff] %v856
        %920 = vst [vmem:[%s178 + $0xf0] sm:$0xff] %v857
        %921 = vst [vmem:[%s178 + $0xf8] sm:$0xff] %v858
        %922 = vst [vmem:[%s178 + $0x100] sm:$0xff] %v859
        %923 = vst [vmem:[%s178 + $0x108] sm:$0xff] %v860
        %924 = vst.msk [vmem:[%s178 + $0x110] sm:$0xff] %vm255, %v861
        %925 = vst [vmem:[%s178 + $0x118] sm:$0xff] %v862
        %926 = vst [vmem:[%s178 + $0x120] sm:$0xff] %v863
        %927 = vst [vmem:[%s178 + $0x128] sm:$0xff] %v864
        %928 = vst [vmem:[%s178 + $0x130] sm:$0xff] %v865
        %929 = vst [vmem:[%s178 + $0x138] sm:$0xff] %v866
        %930 = vst [vmem:[%s178 + $0x140] sm:$0xff] %v867
        %931 = vst.msk [vmem:[%s178 + $0x148] sm:$0xff] %vm255, %v868
        %932 = vst [vmem:[%s178 + $0x150] sm:$0xff] %v869
        %933 = vst [vmem:[%s178 + $0x158] sm:$0xff] %v870
        %934 = vst [vmem:[%s178 + $0x160] sm:$0xff] %v871
        %935 = vst [vmem:[%s178 + $0x168] sm:$0xff] %v872
        %936 = vst [vmem:[%s178 + $0x170] sm:$0xff] %v873
        %937 = vst [vmem:[%s178 + $0x178] sm:$0xff] %v874
        %938 = vst.msk [vmem:[%s178 + $0x180] sm:$0xff] %vm255, %v875
        %939 = vst [vmem:[%s178 + $0x188] sm:$0xff] %v876
        %940 = vst [vmem:[%s178 + $0x190] sm:$0xff] %v877
        %941 = vst [vmem:[%s178 + $0x198] sm:$0xff] %v878
        %942 = vst [vmem:[%s178 + $0x1a0] sm:$0xff] %v879
        %943 = vst [vmem:[%s178 + $0x1a8] sm:$0xff] %v880
        %944 = vst [vmem:[%s178 + $0x1b0] sm:$0xff] %v881
        %945 = vst.msk [vmem:[%s178 + $0x1b8] sm:$0xff] %vm255, %v882
        %946 = vst [vmem:[%s178 + $0x1c0] sm:$0xff] %v883
        %947 = vst [vmem:[%s178 + $0x1c8] sm:$0xff] %v884
        %948 = vst [vmem:[%s178 + $0x1d0] sm:$0xff] %v885
        %949 = vst [vmem:[%s178 + $0x1d8] sm:$0xff] %v886
        %950 = vst [vmem:[%s178 + $0x1e0] sm:$0xff] %v887
        %951 = vst [vmem:[%s178 + $0x1e8] sm:$0xff] %v888
        %952 = vst.msk [vmem:[%s178 + $0x1f0] sm:$0xff] %vm255, %v889
        %s953 = sand.u32 %s79, 1
        %s954 = scalar_lea.sflag [#allocation4], %s953
        %s955 = sand.u32 %s79, 1
        %s956 = smul.addr %s955, 504
        %s957 = scalar_lea.vmem [#allocation5], %s956
        // Predicated region
        $region33: #{tpu_custom_call.1} parent=27 // pred_check
          %p958 = pneg %p89
        $region34: #{tpu_custom_call.1} parent=27 // pred_check_branch
          %960 = sbr.rel (%p958) target = $region36
        $region35: #{tpu_custom_call.1} parent=27 // pred_region
          %s961 = smul.u32 9, %s19
          %s963 = ssub.s32 8064, 8064
          %964 = vsyncadd %s954, %s963
          %s965 = smul.addr %s961, 7
          %s966 = smul.addr %s965, 128
          %s967 = scalar_lea.hbm %s2, %s966
          %s968 = sshll.u32 %s957, 4
          %s969 = int_to_ptr.vmem [resolvable:$true] %s968
          %974 = dma.vmem_to_hbm [thread:$0]  %s969, 8064, %s967, %s954, 896, 896, 56
        $region36: #{tpu_custom_call.1} parent=27 // pred_fallthru
          _
      $region28: #{tpu_custom_call.1} parent=5 // pred_fallthru
        _
      %p975 = scmp.le.s32.totalorder 2, %s14
      // Predicated region
      $region37: #{tpu_custom_call.1} parent=5 // pred_check
        %p976 = pneg %p975
      $region38: #{tpu_custom_call.1} parent=5 // pred_check_branch
        %978 = sbr.rel (%p976) target = $region40
      $region39: #{tpu_custom_call.1} parent=5 // pred_region
        %s979 = ssub.s32 %s14, 2
        // Predicated region
        $region41: #{tpu_custom_call.1} parent=39 // pred_check
          %p980 = pneg %p95
        $region42: #{tpu_custom_call.1} parent=39 // pred_check_branch
          %982 = sbr.rel (%p980) target = $region44
        $region43: #{tpu_custom_call.1} parent=39 // pred_region
          %s983 = sand.u32 %s80, 1
          %s984 = scalar_lea.sflag [#allocation4], %s983
          %s985 = sand.u32 %s80, 1
          %s986 = smul.addr %s985, 504
          %s987 = scalar_lea.vmem [#allocation5], %s986
          %988 = dma.done %s984, 8064
        $region44: #{tpu_custom_call.1} parent=39 // pred_fallthru
          _
      $region40: #{tpu_custom_call.1} parent=5 // pred_fallthru
        _
    $region6: #{tpu_custom_call.1} parent=1 // loop_footer
      %s18 = sadd.s32 1, %s14
    $region7: #{tpu_custom_call.1} parent=1 // loop_footer_branch
      %13 = sbr.rel target = $region3
    $region8: #{tpu_custom_call.1} parent=1 // loop_exit
      _
    %989 = vsyncpa [#allocation3], 1
    %s990 = scalar_lea.sflag [#allocation3], 1
    %991 = vsyncpa %s990, 1
    %992 = vsyncpa [#allocation4], 1
    %s993 = scalar_lea.sflag [#allocation4], 1
    %994 = vsyncpa %s993, 1

</llo_original>
